<compile_context>
chip_gen: v7x
topology: tpu7x:2x2x1
jax: 0.10.0
libtpu: 0.0.40
codegen_flags: <defaults>
</compile_context>

<pallas_src>
import jax
import jax.numpy as jnp
from jax import lax
from jax.experimental import pallas as pl
from jax.experimental.pallas import tpu as pltpu

EPS = 1e-5


def _round_up(n, m):
    return ((n + m - 1) // m) * m


# ---------------------------------------------------------------------------
# Kernel: grid = (batch_tiles, k_tiles over the intermediate dim).
# For each K-slice:  h_k = relu(x @ W1'[:, k] + b1'[k]);  acc += h_k @ W2'[k, :]
# At the last K-slice:  out = relu(acc + b2')
# (BN folded into W1'/b1'/W2'/b2'; dropout = identity in eval mode.)
# ---------------------------------------------------------------------------
def encoder_kernel(x_ref, w1_ref, b1_ref, w2_ref, b2_ref, o_ref, acc_ref):
    k = pl.program_id(1)

    @pl.when(k == 0)
    def _():
        acc_ref[...] = jnp.zeros_like(acc_ref)

    h = jnp.dot(x_ref[...], w1_ref[...], preferred_element_type=jnp.float32)
    h = jnp.maximum(h + b1_ref[...], 0.0)

    acc_ref[...] += jnp.dot(h.astype(w2_ref.dtype), w2_ref[...],
                            preferred_element_type=jnp.float32)

    @pl.when(k == pl.num_programs(1) - 1)
    def _():
        z = acc_ref[...] + b2_ref[...]
        o_ref[...] = jnp.maximum(z, 0.0).astype(o_ref.dtype)


# ---------------------------------------------------------------------------
# Host-side: BN fold + padding + casting (hoisted out of the per-call path).
# ---------------------------------------------------------------------------
def _fold_bn(w, b, gamma, beta, mean, var):
    """Fold eval-mode BatchNorm1d into the preceding Linear (float32)."""
    scale = gamma * lax.rsqrt(var + EPS)          # (out,)
    return w * scale[None, :], (b - mean) * scale + beta


def _pad2(a, rows, cols):
    return jnp.pad(a, ((0, rows - a.shape[0]), (0, cols - a.shape[1])))


def prepare_encoder_params(params, compute_dtype=jnp.bfloat16):
    """Fold BN, pad feature dims to multiples of 128, cast weights once."""
    D_in, D_mid = params["w1"].shape
    D_enc = params["w2"].shape[1]
    D_in_p, D_mid_p, D_enc_p = (_round_up(d, 128) for d in (D_in, D_mid, D_enc))

    w1f, b1f = _fold_bn(params["w1"], params["b1"], params["gamma1"],
                        params["beta1"], params["mean1"], params["var1"])
    w2f, b2f = _fold_bn(params["w2"], params["b2"], params["gamma2"],
                        params["beta2"], params["mean2"], params["var2"])

    return {
        "w1": _pad2(w1f, D_in_p, D_mid_p).astype(compute_dtype),
        "w2": _pad2(w2f, D_mid_p, D_enc_p).astype(compute_dtype),
        "b1": jnp.pad(b1f, (0, D_mid_p - D_mid)).reshape(1, D_mid_p).astype(jnp.float32),
        "b2": jnp.pad(b2f, (0, D_enc_p - D_enc)).reshape(1, D_enc_p).astype(jnp.float32),
        "dims": (D_in, D_mid, D_enc, D_in_p, D_mid_p, D_enc_p),
        "compute_dtype": compute_dtype,
    }


# ---------------------------------------------------------------------------
# VMEM budgeting & tile selection (generation-aware).
# ---------------------------------------------------------------------------
def _vmem_cap_bytes():
    # ~65% of physical VMEM: ~83 MiB on v5e/v6e (128 MiB), ~41 MiB on v7x (64 MiB).
    try:
        cap = int(pltpu.get_tpu_info().vmem_capacity_bytes)
    except Exception:
        cap = 64 * 1024 * 1024          # assume the smallest (v7x) if unknown
    return int(cap * 0.65)


def _vmem_need(bt, tk, D_in_p, D_mid_p, D_enc_p, act_bytes):
    wbuf = 1 if tk == D_mid_p else 2     # grid-invariant weights -> single buffer
    return (2 * bt * D_in_p * act_bytes              # x tile, double-buffered
            + 2 * bt * D_enc_p * 4                   # out tile, double-buffered
            + bt * D_enc_p * 4                       # f32 accumulator scratch
            + bt * tk * 4                            # intermediate h (f32)
            + wbuf * (D_in_p + D_enc_p) * tk * act_bytes   # W1 / W2 tiles
            + wbuf * tk * 4 + D_enc_p * 4)           # b1 / b2 tiles


def _choose_tiles(B, D_in_p, D_mid_p, D_enc_p, act_bytes, vmem_cap):
    B_p8 = _round_up(B, 8)

    # Batch tiles: never split into sub-MXU (<256 row) tiles unless forced.
    bt_opts = []
    if B_p8 <= 1024:
        bt_opts.append(B_p8)
    for c in (1024, 512, 256, 128, 64, 32, 16, 8):
        if c < B_p8 and c not in bt_opts:
            bt_opts.append(c)
    if not bt_opts:
        bt_opts = [B_p8]

    # K tiles over the intermediate dim: whole-K first (weights resident,
    # single-buffered); only exact 128-multiple divisors are used.
    tk_opts = []
    for n_k in (1, 2, 4, 8, 16, 32):
        if D_mid_p % n_k == 0 and (D_mid_p // n_k) % 128 == 0:
            tk_opts.append(D_mid_p // n_k)

    for tk in tk_opts:
        for bt in bt_opts:
            if tk == D_mid_p and D_mid_p > 128 and bt < min(256, B_p8):
                # Prefer K-tiling over collapsing to tiny batch tiles.
                continue
            if _vmem_need(bt, tk, D_in_p, D_mid_p, D_enc_p, act_bytes) <= vmem_cap:
                return bt, tk
    return 8, 128


# ---------------------------------------------------------------------------
# pallas_call builder + forward.
# ---------------------------------------------------------------------------
def _build_call(D_in_p, D_mid_p, D_enc_p, bt, tk, n_b, n_k, out_dtype,
                vmem_limit, allow_single_buffer):
    def spec(shape, index_map, invariant):
        if invariant and allow_single_buffer and getattr(pl, "Buffered", None) is not None:
            return pl.BlockSpec(shape, index_map, pipeline_mode=pl.Buffered(1))
        return pl.BlockSpec(shape, index_map)

    k_inv = (n_k == 1)   # weight blocks are grid-invariant only when K untiled
    in_specs = [
        pl.BlockSpec((bt, D_in_p), lambda i, k: (i, 0)),      # x   (batch-tiled)
        spec((D_in_p, tk), lambda i, k: (0, k), k_inv),       # W1'
        spec((1, tk), lambda i, k: (0, k), k_inv),            # b1'
        spec((tk, D_enc_p), lambda i, k: (k, 0), k_inv),      # W2'
        spec((1, D_enc_p), lambda i, k: (0, 0), True),        # b2' (always invariant)
    ]
    out_spec = pl.BlockSpec((bt, D_enc_p), lambda i, k: (i, 0))

    return pl.pallas_call(
        encoder_kernel,
        out_shape=jax.ShapeDtypeStruct((n_b * bt, D_enc_p), out_dtype),
        grid_spec=pltpu.PrefetchScalarGridSpec(
            num_scalar_prefetch=0,
            grid=(n_b, n_k),
            in_specs=in_specs,
            out_specs=out_spec,
            scratch_shapes=[pltpu.VMEM((bt, D_enc_p), jnp.float32)],
        ),
        compiler_params=pltpu.CompilerParams(
            dimension_semantics=("parallel", "arbitrary"),
            vmem_limit_bytes=vmem_limit,
        ),
    )


def encoder_forward(x, prepared, *, out_dtype=jnp.float32):
    """x: (B, D_in). prepared: output of prepare_encoder_params()."""
    D_in, D_mid, D_enc, D_in_p, D_mid_p, D_enc_p = prepared["dims"]
    compute_dtype = prepared["compute_dtype"]
    B = x.shape[0]
    assert x.shape[1] == D_in

    act_bytes = jnp.dtype(compute_dtype).itemsize
    vmem_cap = _vmem_cap_bytes()
    bt, tk = _choose_tiles(B, D_in_p, D_mid_p, D_enc_p, act_bytes, vmem_cap)

    B_p = _round_up(B, bt)
    n_b, n_k = B_p // bt, D_mid_p // tk

    # Pad/cast x once in compute dtype (zero padding is exact).
    x_p = _pad2(x.astype(compute_dtype), B_p, D_in_p)

    need = _vmem_need(bt, tk, D_in_p, D_mid_p, D_enc_p, act_bytes)
    vmem_limit = int(min(max(need * 1.5 + (4 << 20), 24 << 20),
                         max(vmem_cap, 24 << 20)))

    args = (x_p, prepared["w1"], prepared["b1"], prepared["w2"], prepared["b2"])
    try:
        out = _build_call(D_in_p, D_mid_p, D_enc_p, bt, tk, n_b, n_k, out_dtype,
                          vmem_limit, allow_single_buffer=True)(*args)
    except Exception:
        # Fallback if single-buffered (pl.Buffered(1)) specs are not supported.
        out = _build_call(D_in_p, D_mid_p, D_enc_p, bt, tk, n_b, n_k, out_dtype,
                          vmem_limit, allow_single_buffer=False)(*args)
    return out[:B, :D_enc]


# ---------------------------------------------------------------------------
# Deterministic synthetic params + pure-JAX reference (eval-mode semantics).
# ---------------------------------------------------------------------------
def init_params(key, input_size, intermediate_size, encoding_size):
    ks = jax.random.split(key, 8)
    lim1 = 1.0 / jnp.sqrt(input_size)
    lim2 = 1.0 / jnp.sqrt(intermediate_size)
    return {
        # Linear 1, stored as (in, out) == W^T of PyTorch's (out, in)
        "w1": jax.random.uniform(ks[0], (input_size, intermediate_size),
                                 jnp.float32, -lim1, lim1),
        "b1": jax.random.uniform(ks[1], (intermediate_size,),
                                 jnp.float32, -lim1, lim1),
        # BatchNorm1d(intermediate_size) — eval-mode running stats
        "gamma1": 1.0 + 0.1 * jax.random.normal(ks[2], (intermediate_size,), jnp.float32),
        "beta1": 0.1 * jax.random.normal(ks[3], (intermediate_size,), jnp.float32),
        "mean1": 0.05 * jax.random.normal(ks[4], (intermediate_size,), jnp.float32),
        "var1": 1.0 + 0.1 * jax.random.uniform(ks[5], (intermediate_size,), jnp.float32),
        # Linear 2
        "w2": jax.random.uniform(ks[6], (intermediate_size, encoding_size),
                                 jnp.float32, -lim2, lim2),
        "b2": jax.random.uniform(ks[7], (encoding_size,),
                                 jnp.float32, -lim2, lim2),
        # BatchNorm1d(encoding_size)
        "gamma2": jnp.ones((encoding_size,), jnp.float32),
        "beta2": jnp.zeros((encoding_size,), jnp.float32),
        "mean2": jnp.zeros((encoding_size,), jnp.float32),
        "var2": jnp.ones((encoding_size,), jnp.float32),
    }


def encoder_reference(x, p):
    h = x @ p["w1"] + p["b1"]
    h = (h - p["mean1"]) / jnp.sqrt(p["var1"] + EPS) * p["gamma1"] + p["beta1"]
    h = jnp.maximum(h, 0.0)
    z = h @ p["w2"] + p["b2"]
    z = (z - p["mean2"]) / jnp.sqrt(p["var2"] + EPS) * p["gamma2"] + p["beta2"]
    return jnp.maximum(z, 0.0)


if __name__ == "__main__":
    # Small shapes consistent with the module: flat feature vectors.
    B, INPUT, INTER, ENC = 8, 32, 64, 16

    key = jax.random.PRNGKey(0)
    kx, kp = jax.random.split(key)
    x = jax.random.normal(kx, (B, INPUT), jnp.float32)
    params = init_params(kp, INPUT, INTER, ENC)

    ref = encoder_reference(x, params)

    # f32 MXU path — must match the reference tightly.
    prep_f32 = prepare_encoder_params(params, compute_dtype=jnp.float32)
    out_f32 = jax.block_until_ready(encoder_forward(x, prep_f32))
    assert out_f32.shape == (B, ENC)
    if not bool(jnp.allclose(out_f32, ref, atol=1e-4, rtol=1e-4)):
        raise AssertionError("f32 Pallas kernel output mismatch vs reference")

    # Default bf16 MXU path — BN fold/biases/accumulation/epilogue stay f32.
    prep_bf16 = prepare_encoder_params(params)  # compute_dtype=bfloat16
    out_bf16 = jax.block_until_ready(encoder_forward(x, prep_bf16))
    assert out_bf16.shape == (B, ENC)
    if not bool(jnp.allclose(out_bf16, ref, atol=0.15, rtol=0.05)):
        raise AssertionError("bf16 Pallas kernel output mismatch vs reference")

    print("KERNEL_OK")
</pallas_src>

<mosaic_0001>
module attributes {stable_mosaic.version = 11 : i64} {
  func.func @encoder_kernel(%arg0: i32, %arg1: i32, %arg2: memref<8x128xf32, #tpu.memory_space<vmem>>, %arg3: memref<128x128xf32, #tpu.memory_space<vmem>>, %arg4: memref<1x128xf32, #tpu.memory_space<vmem>>, %arg5: memref<128x128xf32, #tpu.memory_space<vmem>>, %arg6: memref<1x128xf32, #tpu.memory_space<vmem>>, %arg7: memref<8x128xf32, #tpu.memory_space<vmem>>, %arg8: memref<8x128xf32, #tpu.memory_space<vmem>>) attributes {dimension_semantics = [#tpu.dimension_semantics<parallel>, #tpu.dimension_semantics<arbitrary>], iteration_bounds = array<i64: 1, 1>, scalar_prefetch = 0 : i64, scratch_operands = 1 : i64, tpu.core_type = #tpu.core_type<tc>, window_params = [{transform_indices = @transform_0, window_bounds = array<i64: 8, 128>}, {pipeline_mode = #tpu.pipeline_mode<synchronous>, transform_indices = @transform_1, window_bounds = array<i64: 128, 128>}, {pipeline_mode = #tpu.pipeline_mode<synchronous>, transform_indices = @transform_2, window_bounds = array<i64: 1, 128>}, {pipeline_mode = #tpu.pipeline_mode<synchronous>, transform_indices = @transform_3, window_bounds = array<i64: 128, 128>}, {pipeline_mode = #tpu.pipeline_mode<synchronous>, transform_indices = @transform_4, window_bounds = array<i64: 1, 128>}, {transform_indices = @transform_5, window_bounds = array<i64: 8, 128>}]} {
    %c0_i32 = arith.constant 0 : i32
    %0 = arith.cmpi eq, %arg1, %c0_i32 : i32
    %1 = arith.extui %0 : i1 to i32
    %c0_i32_0 = arith.constant 0 : i32
    %2 = arith.cmpi ne, %1, %c0_i32_0 : i32
    scf.if %2 {
      %cst_16 = arith.constant 0.000000e+00 : f32
      %19 = vector.broadcast %cst_16 : f32 to vector<8x128xf32>
      %c0_17 = arith.constant 0 : index
      %c0_18 = arith.constant 0 : index
      %20 = vector.load %arg8[%c0_17, %c0_18] : memref<8x128xf32, #tpu.memory_space<vmem>>, vector<8x128xf32>
      tpu.vector_store %arg8[%c0_17, %c0_18], %19 {strides = array<i32>} : memref<8x128xf32, #tpu.memory_space<vmem>>, vector<8x128xf32>,
    } else {
    }
    %c0 = arith.constant 0 : index
    %c0_1 = arith.constant 0 : index
    %3 = vector.load %arg2[%c0, %c0_1] : memref<8x128xf32, #tpu.memory_space<vmem>>, vector<8x128xf32>
    %c0_2 = arith.constant 0 : index
    %c0_3 = arith.constant 0 : index
    %4 = vector.load %arg3[%c0_2, %c0_3] : memref<128x128xf32, #tpu.memory_space<vmem>>, vector<128x128xf32>
    %cst = arith.constant dense<0.000000e+00> : vector<8x128xf32>
    %5 = tpu.matmul %3, %4, %cst {dimension_numbers = #tpu.dot_dimension_numbers<[1], [0], [0], [1], [0, 0, 1, 1], [], []>} : vector<8x128xf32>, vector<128x128xf32>, vector<8x128xf32> -> vector<8x128xf32>
    %c0_4 = arith.constant 0 : index
    %c0_5 = arith.constant 0 : index
    %6 = vector.load %arg4[%c0_4, %c0_5] : memref<1x128xf32, #tpu.memory_space<vmem>>, vector<1x128xf32>
    %7 = vector.broadcast %6 : vector<1x128xf32> to vector<8x128xf32>
    %8 = arith.addf %5, %7 : vector<8x128xf32>
    %cst_6 = arith.constant 0.000000e+00 : f32
    %9 = vector.broadcast %cst_6 : f32 to vector<8x128xf32>
    %10 = arith.maximumf %8, %9 : vector<8x128xf32>
    %c0_7 = arith.constant 0 : index
    %c0_8 = arith.constant 0 : index
    %11 = vector.load %arg8[%c0_7, %c0_8] : memref<8x128xf32, #tpu.memory_space<vmem>>, vector<8x128xf32>
    %c0_9 = arith.constant 0 : index
    %c0_10 = arith.constant 0 : index
    %12 = vector.load %arg5[%c0_9, %c0_10] : memref<128x128xf32, #tpu.memory_space<vmem>>, vector<128x128xf32>
    %cst_11 = arith.constant dense<0.000000e+00> : vector<8x128xf32>
    %13 = tpu.matmul %10, %12, %cst_11 {dimension_numbers = #tpu.dot_dimension_numbers<[1], [0], [0], [1], [0, 0, 1, 1], [], []>} : vector<8x128xf32>, vector<128x128xf32>, vector<8x128xf32> -> vector<8x128xf32>
    %14 = arith.addf %11, %13 : vector<8x128xf32>
    %c0_12 = arith.constant 0 : index
    %c0_13 = arith.constant 0 : index
    %15 = vector.load %arg8[%c0_12, %c0_13] : memref<8x128xf32, #tpu.memory_space<vmem>>, vector<8x128xf32>
    tpu.vector_store %arg8[%c0_12, %c0_13], %14 {strides = array<i32>} : memref<8x128xf32, #tpu.memory_space<vmem>>, vector<8x128xf32>,
    %c0_i32_14 = arith.constant 0 : i32
    %16 = arith.cmpi eq, %arg1, %c0_i32_14 : i32
    %17 = arith.extui %16 : i1 to i32
    %c0_i32_15 = arith.constant 0 : i32
    %18 = arith.cmpi ne, %17, %c0_i32_15 : i32
    scf.if %18 {
      %c0_16 = arith.constant 0 : index
      %c0_17 = arith.constant 0 : index
      %19 = vector.load %arg8[%c0_16, %c0_17] : memref<8x128xf32, #tpu.memory_space<vmem>>, vector<8x128xf32>
      %c0_18 = arith.constant 0 : index
      %c0_19 = arith.constant 0 : index
      %20 = vector.load %arg6[%c0_18, %c0_19] : memref<1x128xf32, #tpu.memory_space<vmem>>, vector<1x128xf32>
      %21 = vector.broadcast %20 : vector<1x128xf32> to vector<8x128xf32>
      %22 = arith.addf %19, %21 : vector<8x128xf32>
      %cst_20 = arith.constant 0.000000e+00 : f32
      %23 = vector.broadcast %cst_20 : f32 to vector<8x128xf32>
      %24 = arith.maximumf %22, %23 : vector<8x128xf32>
      %c0_21 = arith.constant 0 : index
      %c0_22 = arith.constant 0 : index
      %25 = vector.load %arg7[%c0_21, %c0_22] : memref<8x128xf32, #tpu.memory_space<vmem>>, vector<8x128xf32>
      tpu.vector_store %arg7[%c0_21, %c0_22], %24 {strides = array<i32>} : memref<8x128xf32, #tpu.memory_space<vmem>>, vector<8x128xf32>,
    } else {
    }
    return
  }
  func.func @transform_0(%arg0: i32, %arg1: i32) -> (i32, i32) {
    %c0_i32 = arith.constant 0 : i32
    %c0_i32_0 = arith.constant 0 : i32
    return %arg0, %c0_i32 : i32, i32
  }
  func.func @transform_1(%arg0: i32, %arg1: i32) -> (i32, i32) {
    %c0_i32 = arith.constant 0 : i32
    %c0_i32_0 = arith.constant 0 : i32
    return %c0_i32, %arg1 : i32, i32
  }
  func.func @transform_2(%arg0: i32, %arg1: i32) -> (i32, i32) {
    %c0_i32 = arith.constant 0 : i32
    %c0_i32_0 = arith.constant 0 : i32
    return %c0_i32, %arg1 : i32, i32
  }
  func.func @transform_3(%arg0: i32, %arg1: i32) -> (i32, i32) {
    %c0_i32 = arith.constant 0 : i32
    %c0_i32_0 = arith.constant 0 : i32
    return %arg1, %c0_i32 : i32, i32
  }
  func.func @transform_4(%arg0: i32, %arg1: i32) -> (i32, i32) {
    %c0_i32 = arith.constant 0 : i32
    %c0_i32_0 = arith.constant 0 : i32
    %c0_i32_1 = arith.constant 0 : i32
    return %c0_i32, %c0_i32_0 : i32, i32
  }
  func.func @transform_5(%arg0: i32, %arg1: i32) -> (i32, i32) {
    %c0_i32 = arith.constant 0 : i32
    %c0_i32_0 = arith.constant 0 : i32
    return %arg0, %c0_i32 : i32, i32
  }
}

module attributes {stable_mosaic.version = 11 : i64} {
  func.func @encoder_kernel(%arg0: i32, %arg1: i32, %arg2: memref<8x128xf32, #tpu.memory_space<vmem>>, %arg3: memref<128x128xf32, #tpu.memory_space<vmem>>, %arg4: memref<1x128xf32, #tpu.memory_space<vmem>>, %arg5: memref<128x128xf32, #tpu.memory_space<vmem>>, %arg6: memref<1x128xf32, #tpu.memory_space<vmem>>, %arg7: memref<8x128xf32, #tpu.memory_space<vmem>>, %arg8: memref<8x128xf32, #tpu.memory_space<vmem>>) attributes {dimension_semantics = [#tpu.dimension_semantics<parallel>, #tpu.dimension_semantics<arbitrary>], iteration_bounds = array<i64: 1, 1>, scalar_prefetch = 0 : i64, scratch_operands = 1 : i64, tpu.core_type = #tpu.core_type<tc>, window_params = [{transform_indices = @transform_0, window_bounds = array<i64: 8, 128>}, {transform_indices = @transform_1, window_bounds = array<i64: 128, 128>}, {transform_indices = @transform_2, window_bounds = array<i64: 1, 128>}, {transform_indices = @transform_3, window_bounds = array<i64: 128, 128>}, {pipeline_mode = #tpu.pipeline_mode<synchronous>, transform_indices = @transform_4, window_bounds = array<i64: 1, 128>}, {transform_indices = @transform_5, window_bounds = array<i64: 8, 128>}]} {
    %c0_i32 = arith.constant 0 : i32
    %0 = arith.cmpi eq, %arg1, %c0_i32 : i32
    %1 = arith.extui %0 : i1 to i32
    %c0_i32_0 = arith.constant 0 : i32
    %2 = arith.cmpi ne, %1, %c0_i32_0 : i32
    scf.if %2 {
      %cst_16 = arith.constant 0.000000e+00 : f32
      %19 = vector.broadcast %cst_16 : f32 to vector<8x128xf32>
      %c0_17 = arith.constant 0 : index
      %c0_18 = arith.constant 0 : index
      %20 = vector.load %arg8[%c0_17, %c0_18] : memref<8x128xf32, #tpu.memory_space<vmem>>, vector<8x128xf32>
      tpu.vector_store %arg8[%c0_17, %c0_18], %19 {strides = array<i32>} : memref<8x128xf32, #tpu.memory_space<vmem>>, vector<8x128xf32>,
    } else {
    }
    %c0 = arith.constant 0 : index
    %c0_1 = arith.constant 0 : index
    %3 = vector.load %arg2[%c0, %c0_1] : memref<8x128xf32, #tpu.memory_space<vmem>>, vector<8x128xf32>
    %c0_2 = arith.constant 0 : index
    %c0_3 = arith.constant 0 : index
    %4 = vector.load %arg3[%c0_2, %c0_3] : memref<128x128xf32, #tpu.memory_space<vmem>>, vector<128x128xf32>
    %cst = arith.constant dense<0.000000e+00> : vector<8x128xf32>
    %5 = tpu.matmul %3, %4, %cst {dimension_numbers = #tpu.dot_dimension_numbers<[1], [0], [0], [1], [0, 0, 1, 1], [], []>} : vector<8x128xf32>, vector<128x128xf32>, vector<8x128xf32> -> vector<8x128xf32>
    %c0_4 = arith.constant 0 : index
    %c0_5 = arith.constant 0 : index
    %6 = vector.load %arg4[%c0_4, %c0_5] : memref<1x128xf32, #tpu.memory_space<vmem>>, vector<1x128xf32>
    %7 = vector.broadcast %6 : vector<1x128xf32> to vector<8x128xf32>
    %8 = arith.addf %5, %7 : vector<8x128xf32>
    %cst_6 = arith.constant 0.000000e+00 : f32
    %9 = vector.broadcast %cst_6 : f32 to vector<8x128xf32>
    %10 = arith.maximumf %8, %9 : vector<8x128xf32>
    %c0_7 = arith.constant 0 : index
    %c0_8 = arith.constant 0 : index
    %11 = vector.load %arg8[%c0_7, %c0_8] : memref<8x128xf32, #tpu.memory_space<vmem>>, vector<8x128xf32>
    %c0_9 = arith.constant 0 : index
    %c0_10 = arith.constant 0 : index
    %12 = vector.load %arg5[%c0_9, %c0_10] : memref<128x128xf32, #tpu.memory_space<vmem>>, vector<128x128xf32>
    %cst_11 = arith.constant dense<0.000000e+00> : vector<8x128xf32>
    %13 = tpu.matmul %10, %12, %cst_11 {dimension_numbers = #tpu.dot_dimension_numbers<[1], [0], [0], [1], [0, 0, 1, 1], [], []>} : vector<8x128xf32>, vector<128x128xf32>, vector<8x128xf32> -> vector<8x128xf32>
    %14 = arith.addf %11, %13 : vector<8x128xf32>
    %c0_12 = arith.constant 0 : index
    %c0_13 = arith.constant 0 : index
    %15 = vector.load %arg8[%c0_12, %c0_13] : memref<8x128xf32, #tpu.memory_space<vmem>>, vector<8x128xf32>
    tpu.vector_store %arg8[%c0_12, %c0_13], %14 {strides = array<i32>} : memref<8x128xf32, #tpu.memory_space<vmem>>, vector<8x128xf32>,
    %c0_i32_14 = arith.constant 0 : i32
    %16 = arith.cmpi eq, %arg1, %c0_i32_14 : i32
    %17 = arith.extui %16 : i1 to i32
    %c0_i32_15 = arith.constant 0 : i32
    %18 = arith.cmpi ne, %17, %c0_i32_15 : i32
    scf.if %18 {
      %c0_16 = arith.constant 0 : index
      %c0_17 = arith.constant 0 : index
      %19 = vector.load %arg8[%c0_16, %c0_17] : memref<8x128xf32, #tpu.memory_space<vmem>>, vector<8x128xf32>
      %c0_18 = arith.constant 0 : index
      %c0_19 = arith.constant 0 : index
      %20 = vector.load %arg6[%c0_18, %c0_19] : memref<1x128xf32, #tpu.memory_space<vmem>>, vector<1x128xf32>
      %21 = vector.broadcast %20 : vector<1x128xf32> to vector<8x128xf32>
      %22 = arith.addf %19, %21 : vector<8x128xf32>
      %cst_20 = arith.constant 0.000000e+00 : f32
      %23 = vector.broadcast %cst_20 : f32 to vector<8x128xf32>
      %24 = arith.maximumf %22, %23 : vector<8x128xf32>
      %c0_21 = arith.constant 0 : index
      %c0_22 = arith.constant 0 : index
      %25 = vector.load %arg7[%c0_21, %c0_22] : memref<8x128xf32, #tpu.memory_space<vmem>>, vector<8x128xf32>
      tpu.vector_store %arg7[%c0_21, %c0_22], %24 {strides = array<i32>} : memref<8x128xf32, #tpu.memory_space<vmem>>, vector<8x128xf32>,
    } else {
    }
    return
  }
  func.func @transform_0(%arg0: i32, %arg1: i32) -> (i32, i32) {
    %c0_i32 = arith.constant 0 : i32
    %c0_i32_0 = arith.constant 0 : i32
    return %arg0, %c0_i32 : i32, i32
  }
  func.func @transform_1(%arg0: i32, %arg1: i32) -> (i32, i32) {
    %c0_i32 = arith.constant 0 : i32
    %c0_i32_0 = arith.constant 0 : i32
    return %c0_i32, %arg1 : i32, i32
  }
  func.func @transform_2(%arg0: i32, %arg1: i32) -> (i32, i32) {
    %c0_i32 = arith.constant 0 : i32
    %c0_i32_0 = arith.constant 0 : i32
    return %c0_i32, %arg1 : i32, i32
  }
  func.func @transform_3(%arg0: i32, %arg1: i32) -> (i32, i32) {
    %c0_i32 = arith.constant 0 : i32
    %c0_i32_0 = arith.constant 0 : i32
    return %arg1, %c0_i32 : i32, i32
  }
  func.func @transform_4(%arg0: i32, %arg1: i32) -> (i32, i32) {
    %c0_i32 = arith.constant 0 : i32
    %c0_i32_0 = arith.constant 0 : i32
    %c0_i32_1 = arith.constant 0 : i32
    return %c0_i32, %c0_i32_0 : i32, i32
  }
  func.func @transform_5(%arg0: i32, %arg1: i32) -> (i32, i32) {
    %c0_i32 = arith.constant 0 : i32
    %c0_i32_0 = arith.constant 0 : i32
    return %arg0, %c0_i32 : i32, i32
  }
}

</mosaic_0001>

<llo_original>
// kernel: tpu_custom_call.1
$region0: #{tpu_custom_call.1}
  #allocation0 [shape = 'u32[]', space=smem, size = 0x4, offset = 0x4, fixed_abs, tag = 'smem constant byte address 0x4 - core index']
  #allocation1 [shape = 'u32[144,128]{1,0:T(1,128)}', space=vmem, size = 0x12000, scoped, tag = 'internal scratch']
  #allocation2 [shape = 'f32[8,128]{1,0:T(8,128)}', space=vmem, size = 0x1000, scoped, tag = 'scratch operand']
  %s0 = inlined_call_operand.hbm [shape: f32[8,128], index: 0, kind: input, shape index: {}]
  %s1 = inlined_call_operand.hbm [shape: f32[128,128], index: 1, kind: input, shape index: {}]
  %s2 = inlined_call_operand.vmem [shape: f32[1,128], index: 2, kind: input, shape index: {}]
  %s3 = inlined_call_operand.hbm [shape: f32[128,128], index: 3, kind: input, shape index: {}]
  %s4 = inlined_call_operand.vmem [shape: f32[1,128], index: 4, kind: input, shape index: {}]
  %s5 = inlined_call_operand.hbm [shape: f32[8,128], index: 5, kind: output, shape index: {}]
  %s6 = sld [smem:[#allocation0]]
  $region50: #{tpu_custom_call.1} parent=0
    _
  %s8 = ssub.s32 1, %s6
  %s9 = scalar_select 0, %s8, %s6
  $region1: #{tpu_custom_call.1} parent=0
    #allocation3 [shape = 'u8[4096]{0}', space=vmem, size = 0x1000, scoped, tag = 'input window, operand 0, single buffered']
    #allocation4 [shape = 's32[1]{0}', space=sflag, size = 0x4, scoped, tag = 'scoped memory for tpu_custom_call.1']
    #allocation5 [shape = 's32[1]{0}', space=sflag, size = 0x4, scoped, tag = 'scoped memory for tpu_custom_call.1']
    #allocation6 [shape = 'u8[65536]{0}', space=vmem, size = 0x10000, scoped, tag = 'input window, operand 1, single buffered']
    #allocation7 [shape = 's32[1]{0}', space=sflag, size = 0x4, scoped, tag = 'scoped memory for tpu_custom_call.1']
    #allocation8 [shape = 'u8[65536]{0}', space=vmem, size = 0x10000, scoped, tag = 'input window, operand 3, single buffered']
    #allocation9 [shape = 'u8[4096]{0}', space=vmem, size = 0x1000, scoped, tag = 'output window, operand 0, single buffered']
    %10 = vsyncpa [#allocation4], 0
    %11 = vsyncpa [#allocation7], 0
    %12 = vsyncpa [#allocation5], 0
    // Predicated region
    $region2: #{tpu_custom_call.1} parent=1 // pred_check
      _
    $region3: #{tpu_custom_call.1} parent=1 // pred_check_branch
      %14 = sbr.rel (0) target = $region5
    $region4: #{tpu_custom_call.1} parent=1 // pred_region
      %s16 = ssub.s32 128, 128
      %17 = vsyncadd [#allocation4], %s16
      %s19 = sshll.u32 [#allocation3], 4
      %s20 = int_to_ptr.vmem [resolvable:$true] %s19
      %22 = dma.hbm_to_vmem [thread:$0]  %s0, 128, %s20, [#allocation4]
    $region5: #{tpu_custom_call.1} parent=1 // pred_fallthru
      _
    // Predicated region
    $region6: #{tpu_custom_call.1} parent=1 // pred_check
      _
    $region7: #{tpu_custom_call.1} parent=1 // pred_check_branch
      %24 = sbr.rel (0) target = $region9
    $region8: #{tpu_custom_call.1} parent=1 // pred_region
      %s26 = ssub.s32 2048, 2048
      %27 = vsyncadd [#allocation7], %s26
      %s28 = sshll.u32 [#allocation6], 4
      %s29 = int_to_ptr.vmem [resolvable:$true] %s28
      %34 = dma.hbm_to_vmem [thread:$0]  %s1, 2048, %s29, [#allocation7], 128, 128, 8
    $region9: #{tpu_custom_call.1} parent=1 // pred_fallthru
      _
    // Predicated region
    $region10: #{tpu_custom_call.1} parent=1 // pred_check
      _
    $region11: #{tpu_custom_call.1} parent=1 // pred_check_branch
      %36 = sbr.rel (0) target = $region13
    $region12: #{tpu_custom_call.1} parent=1 // pred_region
      _
    $region13: #{tpu_custom_call.1} parent=1 // pred_fallthru
      _
    // Predicated region
    $region14: #{tpu_custom_call.1} parent=1 // pred_check
      _
    $region15: #{tpu_custom_call.1} parent=1 // pred_check_branch
      %38 = sbr.rel (0) target = $region17
    $region16: #{tpu_custom_call.1} parent=1 // pred_region
      %s40 = ssub.s32 2048, 2048
      %41 = vsyncadd [#allocation7], %s40
      %s42 = sshll.u32 [#allocation8], 4
      %s43 = int_to_ptr.vmem [resolvable:$true] %s42
      %48 = dma.hbm_to_vmem [thread:$0]  %s3, 2048, %s43, [#allocation7], 128, 128, 8
    $region17: #{tpu_custom_call.1} parent=1 // pred_fallthru
      _
    // Predicated region
    $region18: #{tpu_custom_call.1} parent=1 // pred_check
      _
    $region19: #{tpu_custom_call.1} parent=1 // pred_check_branch
      %50 = sbr.rel (0) target = $region21
    $region20: #{tpu_custom_call.1} parent=1 // pred_region
      _
    $region21: #{tpu_custom_call.1} parent=1 // pred_fallthru
      _
    // Predicated region
    $region22: #{tpu_custom_call.1} parent=1 // pred_check
      _
    $region23: #{tpu_custom_call.1} parent=1 // pred_check_branch
      %52 = sbr.rel (0) target = $region25
    $region24: #{tpu_custom_call.1} parent=1 // pred_region
      %53 = dma.done [#allocation4], 128
    $region25: #{tpu_custom_call.1} parent=1 // pred_fallthru
      _
    // Predicated region
    $region26: #{tpu_custom_call.1} parent=1 // pred_check
      _
    $region27: #{tpu_custom_call.1} parent=1 // pred_check_branch
      %55 = sbr.rel (0) target = $region29
    $region28: #{tpu_custom_call.1} parent=1 // pred_region
      %56 = dma.done [#allocation7], 2048
    $region29: #{tpu_custom_call.1} parent=1 // pred_fallthru
      _
    // Predicated region
    $region30: #{tpu_custom_call.1} parent=1 // pred_check
      _
    $region31: #{tpu_custom_call.1} parent=1 // pred_check_branch
      %58 = sbr.rel (0) target = $region33
    $region32: #{tpu_custom_call.1} parent=1 // pred_region
      %59 = dma.done [#allocation7], 2048
    $region33: #{tpu_custom_call.1} parent=1 // pred_fallthru
      _
    %p60 = scmp.eq.s32.totalorder 0, 0
    // Predicated region
    $region34: #{tpu_custom_call.1} parent=1 // pred_check
      %p61 = pneg %p60
    $region35: #{tpu_custom_call.1} parent=1 // pred_check_branch
      %63 = sbr.rel (%p61) target = $region37
    $region36: #{tpu_custom_call.1} parent=1 // pred_region
      %64 = vst [vmem:[#allocation2] sm:$0xff] 0.0
    $region37: #{tpu_custom_call.1} parent=1 // pred_fallthru
      _
    %v65 = vld [vmem:[#allocation3] sm:$0xff]
    %v66 = vld [vmem:[#allocation6] sm:$0xff]
    %v67 = vld [vmem:[#allocation6 + $0x8] sm:$0xff]
    %v68 = vld [vmem:[#allocation6 + $0x10] sm:$0xff]
    %v69 = vld [vmem:[#allocation6 + $0x18] sm:$0xff]
    %v70 = vld [vmem:[#allocation6 + $0x20] sm:$0xff]
    %v71 = vld [vmem:[#allocation6 + $0x28] sm:$0xff]
    %v72 = vld [vmem:[#allocation6 + $0x30] sm:$0xff]
    %v73 = vld [vmem:[#allocation6 + $0x38] sm:$0xff]
    %v74 = vld [vmem:[#allocation6 + $0x40] sm:$0xff]
    %v75 = vld [vmem:[#allocation6 + $0x48] sm:$0xff]
    %v76 = vld [vmem:[#allocation6 + $0x50] sm:$0xff]
    %v77 = vld [vmem:[#allocation6 + $0x58] sm:$0xff]
    %v78 = vld [vmem:[#allocation6 + $0x60] sm:$0xff]
    %v79 = vld [vmem:[#allocation6 + $0x68] sm:$0xff]
    %v80 = vld [vmem:[#allocation6 + $0x70] sm:$0xff]
    %v81 = vld [vmem:[#allocation6 + $0x78] sm:$0xff]
    %v82 = vld [vmem:[%s2] sm:$0x1]
    %v84 = vlaneseq
    %v85 = vshrl.u32 %v84, 7
    %v86 = vsub.s32 0, %v85
    %v87 = vrot.slane %v82, %v86
    %89 = vmatprep.subr.mxu0 0.0
    %90 = vmatpush1.msra.mxu0 %v66
    %91 = vmatprep.subr.mxu0 0.0
    %92 = vmatpush1.msra.mxu0 %v67
    %93 = vmatprep.subr.mxu0 0.0
    %94 = vmatpush1.msra.mxu0 %v68
    %95 = vmatprep.subr.mxu0 0.0
    %96 = vmatpush1.msra.mxu0 %v69
    %97 = vmatprep.subr.mxu0 0.0
    %98 = vmatpush1.msra.mxu0 %v70
    %99 = vmatprep.subr.mxu0 0.0
    %100 = vmatpush1.msra.mxu0 %v71
    %101 = vmatprep.subr.mxu0 0.0
    %102 = vmatpush1.msra.mxu0 %v72
    %103 = vmatprep.subr.mxu0 0.0
    %104 = vmatpush1.msra.mxu0 %v73
    %105 = vmatprep.subr.mxu0 0.0
    %106 = vmatpush1.msra.mxu0 %v74
    %107 = vmatprep.subr.mxu0 0.0
    %108 = vmatpush1.msra.mxu0 %v75
    %109 = vmatprep.subr.mxu0 0.0
    %110 = vmatpush1.msra.mxu0 %v76
    %111 = vmatprep.subr.mxu0 0.0
    %112 = vmatpush1.msra.mxu0 %v77
    %113 = vmatprep.subr.mxu0 0.0
    %114 = vmatpush1.msra.mxu0 %v78
    %115 = vmatprep.subr.mxu0 0.0
    %116 = vmatpush1.msra.mxu0 %v79
    %117 = vmatprep.subr.mxu0 0.0
    %118 = vmatpush1.msra.mxu0 %v80
    %119 = vmatprep.subr.mxu0 0.0
    %120 = vmatpush1.msra.mxu0 %v81
    %121 = vmatprep.subr.mxu0 0.0
    %122 = vmatpush1.msra.mxu0 0.0
    %123 = vmatprep.subr.mxu0 0.0
    %124 = vmatpush1.msra.mxu0 0.0
    %125 = vmatprep.subr.mxu0 0.0
    %126 = vmatpush1.msra.mxu0 0.0
    %127 = vmatprep.subr.mxu0 0.0
    %128 = vmatpush1.msra.mxu0 0.0
    %129 = vmatprep.subr.mxu0 0.0
    %130 = vmatpush1.msra.mxu0 0.0
    %131 = vmatprep.subr.mxu0 0.0
    %132 = vmatpush1.msra.mxu0 0.0
    %133 = vmatprep.subr.mxu0 0.0
    %134 = vmatpush1.msra.mxu0 0.0
    %135 = vmatprep.subr.mxu0 0.0
    %136 = vmatpush1.msra.mxu0 0.0
    %137 = vmatprep.subr.mxu0 0.0
    %138 = vmatpush1.msra.mxu0 0.0
    %139 = vmatprep.subr.mxu0 0.0
    %140 = vmatpush1.msra.mxu0 0.0
    %141 = vmatprep.subr.mxu0 0.0
    %142 = vmatpush1.msra.mxu0 0.0
    %143 = vmatprep.subr.mxu0 0.0
    %144 = vmatpush1.msra.mxu0 0.0
    %145 = vmatprep.subr.mxu0 0.0
    %146 = vmatpush1.msra.mxu0 0.0
    %147 = vmatprep.subr.mxu0 0.0
    %148 = vmatpush1.msra.mxu0 0.0
    %149 = vmatprep.subr.mxu0 0.0
    %150 = vmatpush1.msra.mxu0 0.0
    %151 = vmatprep.subr.mxu0 0.0
    %152 = vmatpush1.msra.mxu0 0.0
    %153 = vmatprep.mubr.f32.mxu0 0.0
    %154 = vmatmul.mubr.f32.gmra.mrb[0].mxu0 %v65
    %v155 = vpop.f32.mrb[0].mxu0
    %v156 = vadd.f32 %v87, %v155
    %v157 = vpop.f32.mrb[0].mxu0
    %158 = vdwg.mxu0
    %v159 = vmax.f32 %v156, 0.0
    %v160 = vld [vmem:[#allocation2] sm:$0xff]
    %v161 = vld [vmem:[#allocation8] sm:$0xff]
    %v162 = vld [vmem:[#allocation8 + $0x8] sm:$0xff]
    %v163 = vld [vmem:[#allocation8 + $0x10] sm:$0xff]
    %v164 = vld [vmem:[#allocation8 + $0x18] sm:$0xff]
    %v165 = vld [vmem:[#allocation8 + $0x20] sm:$0xff]
    %v166 = vld [vmem:[#allocation8 + $0x28] sm:$0xff]
    %v167 = vld [vmem:[#allocation8 + $0x30] sm:$0xff]
    %v168 = vld [vmem:[#allocation8 + $0x38] sm:$0xff]
    %v169 = vld [vmem:[#allocation8 + $0x40] sm:$0xff]
    %v170 = vld [vmem:[#allocation8 + $0x48] sm:$0xff]
    %v171 = vld [vmem:[#allocation8 + $0x50] sm:$0xff]
    %v172 = vld [vmem:[#allocation8 + $0x58] sm:$0xff]
    %v173 = vld [vmem:[#allocation8 + $0x60] sm:$0xff]
    %v174 = vld [vmem:[#allocation8 + $0x68] sm:$0xff]
    %v175 = vld [vmem:[#allocation8 + $0x70] sm:$0xff]
    %v176 = vld [vmem:[#allocation8 + $0x78] sm:$0xff]
    %177 = vmatprep.subr.mxu0 0.0
    %178 = vmatpush1.msra.mxu0 %v161
    %179 = vmatprep.subr.mxu0 0.0
    %180 = vmatpush1.msra.mxu0 %v162
    %181 = vmatprep.subr.mxu0 0.0
    %182 = vmatpush1.msra.mxu0 %v163
    %183 = vmatprep.subr.mxu0 0.0
    %184 = vmatpush1.msra.mxu0 %v164
    %185 = vmatprep.subr.mxu0 0.0
    %186 = vmatpush1.msra.mxu0 %v165
    %187 = vmatprep.subr.mxu0 0.0
    %188 = vmatpush1.msra.mxu0 %v166
    %189 = vmatprep.subr.mxu0 0.0
    %190 = vmatpush1.msra.mxu0 %v167
    %191 = vmatprep.subr.mxu0 0.0
    %192 = vmatpush1.msra.mxu0 %v168
    %193 = vmatprep.subr.mxu0 0.0
    %194 = vmatpush1.msra.mxu0 %v169
    %195 = vmatprep.subr.mxu0 0.0
    %196 = vmatpush1.msra.mxu0 %v170
    %197 = vmatprep.subr.mxu0 0.0
    %198 = vmatpush1.msra.mxu0 %v171
    %199 = vmatprep.subr.mxu0 0.0
    %200 = vmatpush1.msra.mxu0 %v172
    %201 = vmatprep.subr.mxu0 0.0
    %202 = vmatpush1.msra.mxu0 %v173
    %203 = vmatprep.subr.mxu0 0.0
    %204 = vmatpush1.msra.mxu0 %v174
    %205 = vmatprep.subr.mxu0 0.0
    %206 = vmatpush1.msra.mxu0 %v175
    %207 = vmatprep.subr.mxu0 0.0
    %208 = vmatpush1.msra.mxu0 %v176
    %209 = vmatprep.subr.mxu0 0.0
    %210 = vmatpush1.msra.mxu0 0.0
    %211 = vmatprep.subr.mxu0 0.0
    %212 = vmatpush1.msra.mxu0 0.0
    %213 = vmatprep.subr.mxu0 0.0
    %214 = vmatpush1.msra.mxu0 0.0
    %215 = vmatprep.subr.mxu0 0.0
    %216 = vmatpush1.msra.mxu0 0.0
    %217 = vmatprep.subr.mxu0 0.0
    %218 = vmatpush1.msra.mxu0 0.0
    %219 = vmatprep.subr.mxu0 0.0
    %220 = vmatpush1.msra.mxu0 0.0
    %221 = vmatprep.subr.mxu0 0.0
    %222 = vmatpush1.msra.mxu0 0.0
    %223 = vmatprep.subr.mxu0 0.0
    %224 = vmatpush1.msra.mxu0 0.0
    %225 = vmatprep.subr.mxu0 0.0
    %226 = vmatpush1.msra.mxu0 0.0
    %227 = vmatprep.subr.mxu0 0.0
    %228 = vmatpush1.msra.mxu0 0.0
    %229 = vmatprep.subr.mxu0 0.0
    %230 = vmatpush1.msra.mxu0 0.0
    %231 = vmatprep.subr.mxu0 0.0
    %232 = vmatpush1.msra.mxu0 0.0
    %233 = vmatprep.subr.mxu0 0.0
    %234 = vmatpush1.msra.mxu0 0.0
    %235 = vmatprep.subr.mxu0 0.0
    %236 = vmatpush1.msra.mxu0 0.0
    %237 = vmatprep.subr.mxu0 0.0
    %238 = vmatpush1.msra.mxu0 0.0
    %239 = vmatprep.subr.mxu0 0.0
    %240 = vmatpush1.msra.mxu0 0.0
    %241 = vmatprep.mubr.f32.mxu0 0.0
    %242 = vmatmul.mubr.f32.gmra.mrb[0].mxu0 %v159
    %v243 = vpop.f32.mrb[0].mxu0
    %v244 = vadd.f32 0.0, %v243
    %v245 = vpop.f32.mrb[0].mxu0
    %246 = vdwg.mxu0
    %v247 = vadd.f32 %v160, %v244
    %248 = vst [vmem:[#allocation2] sm:$0xff] %v247
    // Predicated region
    $region38: #{tpu_custom_call.1} parent=1 // pred_check
      %p249 = pneg %p60
    $region39: #{tpu_custom_call.1} parent=1 // pred_check_branch
      %251 = sbr.rel (%p249) target = $region41
    $region40: #{tpu_custom_call.1} parent=1 // pred_region
      %v252 = vld [vmem:[#allocation2] sm:$0xff]
      %v253 = vld [vmem:[%s4] sm:$0x1]
      %v255 = vlaneseq
      %v256 = vshrl.u32 %v255, 7
      %v257 = vsub.s32 0, %v256
      %v258 = vrot.slane %v253, %v257
      %v260 = vadd.f32 %v252, %v258
      %v261 = vmax.f32 %v260, 0.0
      %262 = vst [vmem:[#allocation9] sm:$0xff] %v261
    $region41: #{tpu_custom_call.1} parent=1 // pred_fallthru
      _
    // Predicated region
    $region42: #{tpu_custom_call.1} parent=1 // pred_check
      _
    $region43: #{tpu_custom_call.1} parent=1 // pred_check_branch
      %264 = sbr.rel (0) target = $region45
    $region44: #{tpu_custom_call.1} parent=1 // pred_region
      %s266 = ssub.s32 128, 128
      %267 = vsyncadd [#allocation5], %s266
      %s269 = sshll.u32 [#allocation9], 4
      %s270 = int_to_ptr.vmem [resolvable:$true] %s269
      %272 = dma.vmem_to_hbm [thread:$0]  %s270, 128, %s5, [#allocation5]
    $region45: #{tpu_custom_call.1} parent=1 // pred_fallthru
      _
    // Predicated region
    $region46: #{tpu_custom_call.1} parent=1 // pred_check
      _
    $region47: #{tpu_custom_call.1} parent=1 // pred_check_branch
      %274 = sbr.rel (0) target = $region49
    $region48: #{tpu_custom_call.1} parent=1 // pred_region
      %275 = dma.done [#allocation5], 128
    $region49: #{tpu_custom_call.1} parent=1 // pred_fallthru
      _
    %276 = vsyncpa [#allocation4], 1
    %277 = vsyncpa [#allocation7], 1
    %278 = vsyncpa [#allocation5], 1

// kernel: tpu_custom_call.1
$region0: #{tpu_custom_call.1}
  #allocation0 [shape = 'u32[]', space=smem, size = 0x4, offset = 0x4, fixed_abs, tag = 'smem constant byte address 0x4 - core index']
  #allocation1 [shape = 'u32[144,128]{1,0:T(1,128)}', space=vmem, size = 0x12000, scoped, tag = 'internal scratch']
  #allocation2 [shape = 'f32[8,128]{1,0:T(8,128)}', space=vmem, size = 0x1000, scoped, tag = 'scratch operand']
  %s0 = inlined_call_operand.hbm [shape: f32[8,128], index: 0, kind: input, shape index: {}]
  %s1 = inlined_call_operand.hbm [shape: f32[128,128], index: 1, kind: input, shape index: {}]
  %s2 = inlined_call_operand.vmem [shape: f32[1,128], index: 2, kind: input, shape index: {}]
  %s3 = inlined_call_operand.hbm [shape: f32[128,128], index: 3, kind: input, shape index: {}]
  %s4 = inlined_call_operand.vmem [shape: f32[1,128], index: 4, kind: input, shape index: {}]
  %s5 = inlined_call_operand.hbm [shape: f32[8,128], index: 5, kind: output, shape index: {}]
  %s6 = sld [smem:[#allocation0]]
  $region50: #{tpu_custom_call.1} parent=0
    _
  %s8 = ssub.s32 1, %s6
  %s9 = scalar_select 0, %s8, %s6
  $region1: #{tpu_custom_call.1} parent=0
    #allocation3 [shape = 'u8[4096]{0}', space=vmem, size = 0x1000, scoped, tag = 'input window, operand 0, single buffered']
    #allocation4 [shape = 's32[1]{0}', space=sflag, size = 0x4, scoped, tag = 'scoped memory for tpu_custom_call.1']
    #allocation5 [shape = 's32[1]{0}', space=sflag, size = 0x4, scoped, tag = 'scoped memory for tpu_custom_call.1']
    #allocation6 [shape = 'u8[65536]{0}', space=vmem, size = 0x10000, scoped, tag = 'input window, operand 1, single buffered']
    #allocation7 [shape = 's32[1]{0}', space=sflag, size = 0x4, scoped, tag = 'scoped memory for tpu_custom_call.1']
    #allocation8 [shape = 'u8[65536]{0}', space=vmem, size = 0x10000, scoped, tag = 'input window, operand 3, single buffered']
    #allocation9 [shape = 'u8[4096]{0}', space=vmem, size = 0x1000, scoped, tag = 'output window, operand 0, single buffered']
    %10 = vsyncpa [#allocation4], 0
    %11 = vsyncpa [#allocation7], 0
    %12 = vsyncpa [#allocation5], 0
    // Predicated region
    $region2: #{tpu_custom_call.1} parent=1 // pred_check
      _
    $region3: #{tpu_custom_call.1} parent=1 // pred_check_branch
      %14 = sbr.rel (0) target = $region5
    $region4: #{tpu_custom_call.1} parent=1 // pred_region
      %s16 = ssub.s32 128, 128
      %17 = vsyncadd [#allocation4], %s16
      %s19 = sshll.u32 [#allocation3], 4
      %s20 = int_to_ptr.vmem [resolvable:$true] %s19
      %22 = dma.hbm_to_vmem [thread:$0]  %s0, 128, %s20, [#allocation4]
    $region5: #{tpu_custom_call.1} parent=1 // pred_fallthru
      _
    // Predicated region
    $region6: #{tpu_custom_call.1} parent=1 // pred_check
      _
    $region7: #{tpu_custom_call.1} parent=1 // pred_check_branch
      %24 = sbr.rel (0) target = $region9
    $region8: #{tpu_custom_call.1} parent=1 // pred_region
      %s26 = ssub.s32 2048, 2048
      %27 = vsyncadd [#allocation7], %s26
      %s28 = sshll.u32 [#allocation6], 4
      %s29 = int_to_ptr.vmem [resolvable:$true] %s28
      %34 = dma.hbm_to_vmem [thread:$0]  %s1, 2048, %s29, [#allocation7], 128, 128, 8
    $region9: #{tpu_custom_call.1} parent=1 // pred_fallthru
      _
    // Predicated region
    $region10: #{tpu_custom_call.1} parent=1 // pred_check
      _
    $region11: #{tpu_custom_call.1} parent=1 // pred_check_branch
      %36 = sbr.rel (0) target = $region13
    $region12: #{tpu_custom_call.1} parent=1 // pred_region
      _
    $region13: #{tpu_custom_call.1} parent=1 // pred_fallthru
      _
    // Predicated region
    $region14: #{tpu_custom_call.1} parent=1 // pred_check
      _
    $region15: #{tpu_custom_call.1} parent=1 // pred_check_branch
      %38 = sbr.rel (0) target = $region17
    $region16: #{tpu_custom_call.1} parent=1 // pred_region
      %s40 = ssub.s32 2048, 2048
      %41 = vsyncadd [#allocation7], %s40
      %s42 = sshll.u32 [#allocation8], 4
      %s43 = int_to_ptr.vmem [resolvable:$true] %s42
      %48 = dma.hbm_to_vmem [thread:$0]  %s3, 2048, %s43, [#allocation7], 128, 128, 8
    $region17: #{tpu_custom_call.1} parent=1 // pred_fallthru
      _
    // Predicated region
    $region18: #{tpu_custom_call.1} parent=1 // pred_check
      _
    $region19: #{tpu_custom_call.1} parent=1 // pred_check_branch
      %50 = sbr.rel (0) target = $region21
    $region20: #{tpu_custom_call.1} parent=1 // pred_region
      _
    $region21: #{tpu_custom_call.1} parent=1 // pred_fallthru
      _
    // Predicated region
    $region22: #{tpu_custom_call.1} parent=1 // pred_check
      _
    $region23: #{tpu_custom_call.1} parent=1 // pred_check_branch
      %52 = sbr.rel (0) target = $region25
    $region24: #{tpu_custom_call.1} parent=1 // pred_region
      %53 = dma.done [#allocation4], 128
    $region25: #{tpu_custom_call.1} parent=1 // pred_fallthru
      _
    // Predicated region
    $region26: #{tpu_custom_call.1} parent=1 // pred_check
      _
    $region27: #{tpu_custom_call.1} parent=1 // pred_check_branch
      %55 = sbr.rel (0) target = $region29
    $region28: #{tpu_custom_call.1} parent=1 // pred_region
      %56 = dma.done [#allocation7], 2048
    $region29: #{tpu_custom_call.1} parent=1 // pred_fallthru
      _
    // Predicated region
    $region30: #{tpu_custom_call.1} parent=1 // pred_check
      _
    $region31: #{tpu_custom_call.1} parent=1 // pred_check_branch
      %58 = sbr.rel (0) target = $region33
    $region32: #{tpu_custom_call.1} parent=1 // pred_region
      %59 = dma.done [#allocation7], 2048
    $region33: #{tpu_custom_call.1} parent=1 // pred_fallthru
      _
    %p60 = scmp.eq.s32.totalorder 0, 0
    // Predicated region
    $region34: #{tpu_custom_call.1} parent=1 // pred_check
      %p61 = pneg %p60
    $region35: #{tpu_custom_call.1} parent=1 // pred_check_branch
      %63 = sbr.rel (%p61) target = $region37
    $region36: #{tpu_custom_call.1} parent=1 // pred_region
      %64 = vst [vmem:[#allocation2] sm:$0xff] 0.0
    $region37: #{tpu_custom_call.1} parent=1 // pred_fallthru
      _
    %v65 = vld [vmem:[#allocation3] sm:$0xff]
    %v66 = vld [vmem:[#allocation6] sm:$0xff]
    %v67 = vld [vmem:[#allocation6 + $0x8] sm:$0xff]
    %v68 = vld [vmem:[#allocation6 + $0x10] sm:$0xff]
    %v69 = vld [vmem:[#allocation6 + $0x18] sm:$0xff]
    %v70 = vld [vmem:[#allocation6 + $0x20] sm:$0xff]
    %v71 = vld [vmem:[#allocation6 + $0x28] sm:$0xff]
    %v72 = vld [vmem:[#allocation6 + $0x30] sm:$0xff]
    %v73 = vld [vmem:[#allocation6 + $0x38] sm:$0xff]
    %v74 = vld [vmem:[#allocation6 + $0x40] sm:$0xff]
    %v75 = vld [vmem:[#allocation6 + $0x48] sm:$0xff]
    %v76 = vld [vmem:[#allocation6 + $0x50] sm:$0xff]
    %v77 = vld [vmem:[#allocation6 + $0x58] sm:$0xff]
    %v78 = vld [vmem:[#allocation6 + $0x60] sm:$0xff]
    %v79 = vld [vmem:[#allocation6 + $0x68] sm:$0xff]
    %v80 = vld [vmem:[#allocation6 + $0x70] sm:$0xff]
    %v81 = vld [vmem:[#allocation6 + $0x78] sm:$0xff]
    %v82 = vld [vmem:[%s2] sm:$0x1]
    %v84 = vlaneseq
    %v85 = vshrl.u32 %v84, 7
    %v86 = vsub.s32 0, %v85
    %v87 = vrot.slane %v82, %v86
    %89 = vmatprep.subr.mxu0 0.0
    %90 = vmatpush1.msra.mxu0 %v66
    %91 = vmatprep.subr.mxu0 0.0
    %92 = vmatpush1.msra.mxu0 %v67
    %93 = vmatprep.subr.mxu0 0.0
    %94 = vmatpush1.msra.mxu0 %v68
    %95 = vmatprep.subr.mxu0 0.0
    %96 = vmatpush1.msra.mxu0 %v69
    %97 = vmatprep.subr.mxu0 0.0
    %98 = vmatpush1.msra.mxu0 %v70
    %99 = vmatprep.subr.mxu0 0.0
    %100 = vmatpush1.msra.mxu0 %v71
    %101 = vmatprep.subr.mxu0 0.0
    %102 = vmatpush1.msra.mxu0 %v72
    %103 = vmatprep.subr.mxu0 0.0
    %104 = vmatpush1.msra.mxu0 %v73
    %105 = vmatprep.subr.mxu0 0.0
    %106 = vmatpush1.msra.mxu0 %v74
    %107 = vmatprep.subr.mxu0 0.0
    %108 = vmatpush1.msra.mxu0 %v75
    %109 = vmatprep.subr.mxu0 0.0
    %110 = vmatpush1.msra.mxu0 %v76
    %111 = vmatprep.subr.mxu0 0.0
    %112 = vmatpush1.msra.mxu0 %v77
    %113 = vmatprep.subr.mxu0 0.0
    %114 = vmatpush1.msra.mxu0 %v78
    %115 = vmatprep.subr.mxu0 0.0
    %116 = vmatpush1.msra.mxu0 %v79
    %117 = vmatprep.subr.mxu0 0.0
    %118 = vmatpush1.msra.mxu0 %v80
    %119 = vmatprep.subr.mxu0 0.0
    %120 = vmatpush1.msra.mxu0 %v81
    %121 = vmatprep.subr.mxu0 0.0
    %122 = vmatpush1.msra.mxu0 0.0
    %123 = vmatprep.subr.mxu0 0.0
    %124 = vmatpush1.msra.mxu0 0.0
    %125 = vmatprep.subr.mxu0 0.0
    %126 = vmatpush1.msra.mxu0 0.0
    %127 = vmatprep.subr.mxu0 0.0
    %128 = vmatpush1.msra.mxu0 0.0
    %129 = vmatprep.subr.mxu0 0.0
    %130 = vmatpush1.msra.mxu0 0.0
    %131 = vmatprep.subr.mxu0 0.0
    %132 = vmatpush1.msra.mxu0 0.0
    %133 = vmatprep.subr.mxu0 0.0
    %134 = vmatpush1.msra.mxu0 0.0
    %135 = vmatprep.subr.mxu0 0.0
    %136 = vmatpush1.msra.mxu0 0.0
    %137 = vmatprep.subr.mxu0 0.0
    %138 = vmatpush1.msra.mxu0 0.0
    %139 = vmatprep.subr.mxu0 0.0
    %140 = vmatpush1.msra.mxu0 0.0
    %141 = vmatprep.subr.mxu0 0.0
    %142 = vmatpush1.msra.mxu0 0.0
    %143 = vmatprep.subr.mxu0 0.0
    %144 = vmatpush1.msra.mxu0 0.0
    %145 = vmatprep.subr.mxu0 0.0
    %146 = vmatpush1.msra.mxu0 0.0
    %147 = vmatprep.subr.mxu0 0.0
    %148 = vmatpush1.msra.mxu0 0.0
    %149 = vmatprep.subr.mxu0 0.0
    %150 = vmatpush1.msra.mxu0 0.0
    %151 = vmatprep.subr.mxu0 0.0
    %152 = vmatpush1.msra.mxu0 0.0
    %153 = vmatprep.mubr.f32.mxu0 0.0
    %154 = vmatmul.mubr.f32.gmra.mrb[0].mxu0 %v65
    %v155 = vpop.f32.mrb[0].mxu0
    %v156 = vadd.f32 %v87, %v155
    %v157 = vpop.f32.mrb[0].mxu0
    %158 = vdwg.mxu0
    %v159 = vmax.f32 %v156, 0.0
    %v160 = vld [vmem:[#allocation2] sm:$0xff]
    %v161 = vld [vmem:[#allocation8] sm:$0xff]
    %v162 = vld [vmem:[#allocation8 + $0x8] sm:$0xff]
    %v163 = vld [vmem:[#allocation8 + $0x10] sm:$0xff]
    %v164 = vld [vmem:[#allocation8 + $0x18] sm:$0xff]
    %v165 = vld [vmem:[#allocation8 + $0x20] sm:$0xff]
    %v166 = vld [vmem:[#allocation8 + $0x28] sm:$0xff]
    %v167 = vld [vmem:[#allocation8 + $0x30] sm:$0xff]
    %v168 = vld [vmem:[#allocation8 + $0x38] sm:$0xff]
    %v169 = vld [vmem:[#allocation8 + $0x40] sm:$0xff]
    %v170 = vld [vmem:[#allocation8 + $0x48] sm:$0xff]
    %v171 = vld [vmem:[#allocation8 + $0x50] sm:$0xff]
    %v172 = vld [vmem:[#allocation8 + $0x58] sm:$0xff]
    %v173 = vld [vmem:[#allocation8 + $0x60] sm:$0xff]
    %v174 = vld [vmem:[#allocation8 + $0x68] sm:$0xff]
    %v175 = vld [vmem:[#allocation8 + $0x70] sm:$0xff]
    %v176 = vld [vmem:[#allocation8 + $0x78] sm:$0xff]
    %177 = vmatprep.subr.mxu0 0.0
    %178 = vmatpush1.msra.mxu0 %v161
    %179 = vmatprep.subr.mxu0 0.0
    %180 = vmatpush1.msra.mxu0 %v162
    %181 = vmatprep.subr.mxu0 0.0
    %182 = vmatpush1.msra.mxu0 %v163
    %183 = vmatprep.subr.mxu0 0.0
    %184 = vmatpush1.msra.mxu0 %v164
    %185 = vmatprep.subr.mxu0 0.0
    %186 = vmatpush1.msra.mxu0 %v165
    %187 = vmatprep.subr.mxu0 0.0
    %188 = vmatpush1.msra.mxu0 %v166
    %189 = vmatprep.subr.mxu0 0.0
    %190 = vmatpush1.msra.mxu0 %v167
    %191 = vmatprep.subr.mxu0 0.0
    %192 = vmatpush1.msra.mxu0 %v168
    %193 = vmatprep.subr.mxu0 0.0
    %194 = vmatpush1.msra.mxu0 %v169
    %195 = vmatprep.subr.mxu0 0.0
    %196 = vmatpush1.msra.mxu0 %v170
    %197 = vmatprep.subr.mxu0 0.0
    %198 = vmatpush1.msra.mxu0 %v171
    %199 = vmatprep.subr.mxu0 0.0
    %200 = vmatpush1.msra.mxu0 %v172
    %201 = vmatprep.subr.mxu0 0.0
    %202 = vmatpush1.msra.mxu0 %v173
    %203 = vmatprep.subr.mxu0 0.0
    %204 = vmatpush1.msra.mxu0 %v174
    %205 = vmatprep.subr.mxu0 0.0
    %206 = vmatpush1.msra.mxu0 %v175
    %207 = vmatprep.subr.mxu0 0.0
    %208 = vmatpush1.msra.mxu0 %v176
    %209 = vmatprep.subr.mxu0 0.0
    %210 = vmatpush1.msra.mxu0 0.0
    %211 = vmatprep.subr.mxu0 0.0
    %212 = vmatpush1.msra.mxu0 0.0
    %213 = vmatprep.subr.mxu0 0.0
    %214 = vmatpush1.msra.mxu0 0.0
    %215 = vmatprep.subr.mxu0 0.0
    %216 = vmatpush1.msra.mxu0 0.0
    %217 = vmatprep.subr.mxu0 0.0
    %218 = vmatpush1.msra.mxu0 0.0
    %219 = vmatprep.subr.mxu0 0.0
    %220 = vmatpush1.msra.mxu0 0.0
    %221 = vmatprep.subr.mxu0 0.0
    %222 = vmatpush1.msra.mxu0 0.0
    %223 = vmatprep.subr.mxu0 0.0
    %224 = vmatpush1.msra.mxu0 0.0
    %225 = vmatprep.subr.mxu0 0.0
    %226 = vmatpush1.msra.mxu0 0.0
    %227 = vmatprep.subr.mxu0 0.0
    %228 = vmatpush1.msra.mxu0 0.0
    %229 = vmatprep.subr.mxu0 0.0
    %230 = vmatpush1.msra.mxu0 0.0
    %231 = vmatprep.subr.mxu0 0.0
    %232 = vmatpush1.msra.mxu0 0.0
    %233 = vmatprep.subr.mxu0 0.0
    %234 = vmatpush1.msra.mxu0 0.0
    %235 = vmatprep.subr.mxu0 0.0
    %236 = vmatpush1.msra.mxu0 0.0
    %237 = vmatprep.subr.mxu0 0.0
    %238 = vmatpush1.msra.mxu0 0.0
    %239 = vmatprep.subr.mxu0 0.0
    %240 = vmatpush1.msra.mxu0 0.0
    %241 = vmatprep.mubr.f32.mxu0 0.0
    %242 = vmatmul.mubr.f32.gmra.mrb[0].mxu0 %v159
    %v243 = vpop.f32.mrb[0].mxu0
    %v244 = vadd.f32 0.0, %v243
    %v245 = vpop.f32.mrb[0].mxu0
    %246 = vdwg.mxu0
    %v247 = vadd.f32 %v160, %v244
    %248 = vst [vmem:[#allocation2] sm:$0xff] %v247
    // Predicated region
    $region38: #{tpu_custom_call.1} parent=1 // pred_check
      %p249 = pneg %p60
    $region39: #{tpu_custom_call.1} parent=1 // pred_check_branch
      %251 = sbr.rel (%p249) target = $region41
    $region40: #{tpu_custom_call.1} parent=1 // pred_region
      %v252 = vld [vmem:[#allocation2] sm:$0xff]
      %v253 = vld [vmem:[%s4] sm:$0x1]
      %v255 = vlaneseq
      %v256 = vshrl.u32 %v255, 7
      %v257 = vsub.s32 0, %v256
      %v258 = vrot.slane %v253, %v257
      %v260 = vadd.f32 %v252, %v258
      %v261 = vmax.f32 %v260, 0.0
      %262 = vst [vmem:[#allocation9] sm:$0xff] %v261
    $region41: #{tpu_custom_call.1} parent=1 // pred_fallthru
      _
    // Predicated region
    $region42: #{tpu_custom_call.1} parent=1 // pred_check
      _
    $region43: #{tpu_custom_call.1} parent=1 // pred_check_branch
      %264 = sbr.rel (0) target = $region45
    $region44: #{tpu_custom_call.1} parent=1 // pred_region
      %s266 = ssub.s32 128, 128
      %267 = vsyncadd [#allocation5], %s266
      %s269 = sshll.u32 [#allocation9], 4
      %s270 = int_to_ptr.vmem [resolvable:$true] %s269
      %272 = dma.vmem_to_hbm [thread:$0]  %s270, 128, %s5, [#allocation5]
    $region45: #{tpu_custom_call.1} parent=1 // pred_fallthru
      _
    // Predicated region
    $region46: #{tpu_custom_call.1} parent=1 // pred_check
      _
    $region47: #{tpu_custom_call.1} parent=1 // pred_check_branch
      %274 = sbr.rel (0) target = $region49
    $region48: #{tpu_custom_call.1} parent=1 // pred_region
      %275 = dma.done [#allocation5], 128
    $region49: #{tpu_custom_call.1} parent=1 // pred_fallthru
      _
    %276 = vsyncpa [#allocation4], 1
    %277 = vsyncpa [#allocation7], 1
    %278 = vsyncpa [#allocation5], 1

</llo_original>
